<compile_context>
chip_gen: v7x
topology: tpu7x:2x2x1
jax: 0.10.0
libtpu: 0.0.40
codegen_flags: <defaults>
</compile_context>

<pallas_src>
import functools
import math

import jax
import jax.numpy as jnp
import numpy as np
from jax import lax
from jax.experimental import pallas as pl
from jax.experimental.pallas import tpu as pltpu


def _cdiv(a, b):
    return -(-a // b)


def _conv1d_glu_kernel(*refs, k, dilation, padding, rh, pad_l, t_tile, c_out,
                       use_residual, nt, t_valid_last, has_rh_stream, approx_softsign):
    # refs (has_rh_stream): x, xr, sp, w, bc, wsp, bsp, out, win
    # refs (otherwise)    : x,     sp, w, bc, wsp, bsp, out, win
    #
    # x_ref   : (1, C_in, TT)       current (unpadded) time tile, NCT layout
    # xr_ref  : (1, C_in, RHB)      first 128-block of the NEXT tile (non-causal right halo)
    # sp_ref  : (1, TT, E)          speaker embedding, native (B, T, E) layout
    # w_ref   : (K, 2*C_out, C_in)  per-tap conv weights
    # bc_ref  : (2*C_out, 1)        conv bias (f32)
    # wsp_ref : (C_out, E)          speaker projection weight
    # bsp_ref : (C_out, 1)          speaker projection bias (f32)
    # out_ref : (1, C_out, TT)      output tile, NCT layout
    # win_ref : (C_in, pad_l+TT+RHB) persistent window scratch (compute dtype)
    if has_rh_stream:
        x_ref, xr_ref, sp_ref, w_ref, bc_ref, wsp_ref, bsp_ref, out_ref, win_ref = refs
    else:
        x_ref, sp_ref, w_ref, bc_ref, wsp_ref, bsp_ref, out_ref, win_ref = refs

    t = pl.program_id(1)
    c_in = win_ref.shape[0]

    # ------------- window assembly: [left halo | current tile | right halo] -------------
    if padding > 0:
        @pl.when(t == 0)
        def _():
            # left zero pad of the sequence
            win_ref[:, pad_l - padding:pad_l] = jnp.zeros((c_in, padding), win_ref.dtype)

        if nt > 1:
            @pl.when(t > 0)
            def _():
                # halo carried from the previous tile of the SAME batch row (time axis is
                # sequential); must run BEFORE the main fill overwrites the source columns.
                win_ref[:, pad_l - padding:pad_l] = (
                    win_ref[:, pad_l + t_tile - padding:pad_l + t_tile])

    # one lane-aligned copy of the tile into the window (also performs the compute-dtype cast)
    win_ref[:, pad_l:pad_l + t_tile] = x_ref[0].astype(win_ref.dtype)

    if has_rh_stream:
        # non-causal right halo: first rh columns of the next tile (small lookahead stream)
        win_ref[:, pad_l + t_tile:pad_l + t_tile + rh] = xr_ref[0, :, :rh].astype(win_ref.dtype)

    if rh > 0:
        @pl.when(t == nt - 1)
        def _():
            # zero every used window column past the true end of the sequence
            win_ref[:, pad_l + t_valid_last:pad_l + t_tile + rh] = jnp.zeros(
                (c_in, t_tile + rh - t_valid_last), win_ref.dtype)

        if has_rh_stream and t_valid_last < rh:
            # deep-dilation edge case: the second-to-last tile's lookahead also crosses T
            @pl.when(t == nt - 2)
            def _():
                win_ref[:, pad_l + t_tile + t_valid_last:pad_l + t_tile + rh] = jnp.zeros(
                    (c_in, rh - t_valid_last), win_ref.dtype)

    # ------------- dilated conv: K accumulating per-tap MXU matmuls (no im2col) ----------
    base = pad_l - padding
    acc = jnp.dot(w_ref[0], win_ref[:, base:base + t_tile],
                  preferred_element_type=jnp.float32)
    for j in range(1, k):
        off = base + j * dilation
        acc = acc + jnp.dot(w_ref[j], win_ref[:, off:off + t_tile],
                            preferred_element_type=jnp.float32)
    acc = acc + bc_ref[...]                                       # (2*C_out, TT), f32

    a = acc[:c_out]
    b = acc[c_out:]

    # speaker projection (contracts E directly from the native (T, E) layout) + softsign
    sp = lax.dot_general(wsp_ref[...], sp_ref[0],
                         dimension_numbers=(((1,), (1,)), ((), ())),
                         preferred_element_type=jnp.float32)
    sp = sp + bsp_ref[...]                                        # (C_out, TT), f32
    if approx_softsign:
        ss = sp * pl.reciprocal(1.0 + jnp.abs(sp), approx=True)   # EUP slot, bf16 path
    else:
        ss = sp / (1.0 + jnp.abs(sp))                             # exact path
    a = a + ss

    glu = a * jax.nn.sigmoid(b)
    if use_residual:
        # residual comes from the native-precision input block (exact even in bf16 mode)
        glu = (glu + x_ref[0].astype(jnp.float32)) * np.float32(math.sqrt(0.5))

    out_ref[0] = glu.astype(out_ref.dtype)


def conv1d_glu(x_nct, speaker_embed_bte, w_conv, b_conv, w_sp, b_sp, *,
               kernel_size, dilation=1, causal=False, residual=False,
               time_tile=None, compute_dtype=jnp.bfloat16):
    """x_nct: (B, C_in, T); speaker_embed_bte: (B, T, E); returns (B, C_out, T) in x's dtype."""
    B, C_in, T = x_nct.shape
    C_out2 = w_conv.shape[0]
    C_out = C_out2 // 2
    K = kernel_size
    E = w_sp.shape[1]
    out_dtype = x_nct.dtype
    if residual and C_in != C_out:
        raise ValueError("residual=True requires in_channels == out_channels")
    if (not causal) and (K % 2 == 0):
        raise ValueError("non-causal path assumes an odd kernel_size "
                         "(symmetric PyTorch padding keeps the sequence length)")

    H = (K - 1) * dilation
    padding = H if causal else (K - 1) // 2 * dilation            # PyTorch-equivalent left pad
    rh = H - padding                                              # right halo (0 when causal)
    pad_l = 128 * _cdiv(padding, 128) if padding > 0 else 0       # lane-aligned tile-fill offset
    rhb = 128 * _cdiv(rh, 128) if rh > 0 else 0                   # right-halo stream block width

    # ---- chip-aware VMEM budget (v7x: 64 MiB physical -> smaller tiles; v5e/v6e: 128 MiB) ----
    try:
        cap = int(pltpu.get_tpu_info().vmem_capacity_bytes)
    except Exception:
        cap = 64 << 20
    budget = min(int(cap * 0.40), 48 << 20)
    vmem_limit = max(32 << 20, min(int(cap * 0.75), 96 << 20))
    if time_tile is None:
        time_tile = 4096 if budget >= (40 << 20) else 2048

    in_b = jnp.dtype(x_nct.dtype).itemsize
    sp_b = jnp.dtype(speaker_embed_bte.dtype).itemsize
    out_b = jnp.dtype(out_dtype).itemsize
    cmp_b = jnp.dtype(compute_dtype).itemsize

    def vmem_use(tt):
        return (C_in * (pad_l + tt + rhb) * cmp_b                 # window scratch
                + 2 * C_in * tt * in_b                            # x blocks (double-buffered)
                + 2 * tt * E * sp_b                               # speaker blocks
                + 2 * C_out * tt * out_b                          # output blocks
                + (2 * C_in * rhb * in_b if rh > 0 else 0)        # right-halo stream blocks
                + 3 * C_out2 * tt * 4)                            # f32 acc + epilogue temporaries

    TT = max(128, 128 * _cdiv(min(time_tile, T), 128))
    while TT > 128 and vmem_use(TT) > budget:
        TT -= 128
    # correctness guards: the tile must cover the halo carry / right-halo block (deep dilation)
    TT = max(TT, 128, 128 * _cdiv(padding, 128), rhb)
    if rhb > 0 and TT % rhb:
        TT = rhb * _cdiv(TT, rhb)

    if T <= TT:
        TT, NT = T, 1                                             # single tile: block == full dim
    else:
        NT = _cdiv(T, TT)
    t_valid_last = T - (NT - 1) * TT
    has_rh_stream = (rh > 0) and (NT > 1)

    # ---- small host-side weight prep (weights only; x is consumed unpadded / uncast) ----
    w_k = jnp.transpose(w_conv, (2, 0, 1)).astype(compute_dtype)  # (K, 2*C_out, C_in)
    b_c = b_conv.reshape(C_out2, 1).astype(jnp.float32)
    w_s = w_sp.astype(compute_dtype)                              # (C_out, E)
    b_s = b_sp.reshape(C_out, 1).astype(jnp.float32)

    kernel = functools.partial(
        _conv1d_glu_kernel, k=K, dilation=dilation, padding=padding, rh=rh, pad_l=pad_l,
        t_tile=TT, c_out=C_out, use_residual=residual, nt=NT, t_valid_last=t_valid_last,
        has_rh_stream=has_rh_stream,
        approx_softsign=(jnp.dtype(compute_dtype) != jnp.dtype(jnp.float32)))

    in_specs = [pl.BlockSpec((1, C_in, TT), lambda b, t: (b, 0, t))]
    inputs = [x_nct]
    if has_rh_stream:
        step_rh = TT // rhb
        nblk_rh = _cdiv(T, rhb)
        in_specs.append(pl.BlockSpec(
            (1, C_in, rhb),
            lambda b, t: (b, 0, jnp.minimum((t + 1) * step_rh, nblk_rh - 1))))
        inputs.append(x_nct)
    in_specs += [
        pl.BlockSpec((1, TT, E), lambda b, t: (b, t, 0)),          # speaker embedding
        pl.BlockSpec((K, C_out2, C_in), lambda b, t: (0, 0, 0)),   # per-tap conv weights
        pl.BlockSpec((C_out2, 1), lambda b, t: (0, 0)),            # conv bias
        pl.BlockSpec((C_out, E), lambda b, t: (0, 0)),             # speaker weight
        pl.BlockSpec((C_out, 1), lambda b, t: (0, 0)),             # speaker bias
    ]
    inputs += [speaker_embed_bte, w_k, b_c, w_s, b_s]

    out_nct = pl.pallas_call(
        kernel,
        out_shape=jax.ShapeDtypeStruct((B, C_out, T), out_dtype),
        grid_spec=pltpu.PrefetchScalarGridSpec(
            num_scalar_prefetch=0,
            grid=(B, NT),
            in_specs=in_specs,
            out_specs=pl.BlockSpec((1, C_out, TT), lambda b, t: (b, 0, t)),
            scratch_shapes=[pltpu.VMEM((C_in, pad_l + TT + rhb), compute_dtype)],
        ),
        compiler_params=pltpu.CompilerParams(
            # time axis must stay sequential ("arbitrary") for the halo carry;
            # batch axis is megacore-parallel.
            dimension_semantics=("parallel", "arbitrary"),
            vmem_limit_bytes=vmem_limit),
    )(*inputs)
    return out_nct


def conv1d_glu_reference(x_nct, speaker_embed_bte, w_conv, b_conv, w_sp, b_sp, *,
                         kernel_size, dilation, causal, residual):
    """Pure-JAX reference mirroring the PyTorch forward (eval mode)."""
    B, C_in, T = x_nct.shape
    C_out = w_conv.shape[0] // 2
    padding = (kernel_size - 1) * dilation if causal else (kernel_size - 1) // 2 * dilation
    y = lax.conv_general_dilated(
        x_nct.astype(jnp.float32), w_conv.astype(jnp.float32),
        window_strides=(1,), padding=[(padding, padding)],
        rhs_dilation=(dilation,), dimension_numbers=("NCH", "OIH", "NCH"),
        precision=lax.Precision.HIGHEST)
    y = y + b_conv[None, :, None]
    if causal:
        y = y[:, :, :T]
    a, b = y[:, :C_out, :], y[:, C_out:, :]
    sp = jnp.einsum("bte,oe->bto", speaker_embed_bte.astype(jnp.float32),
                    w_sp.astype(jnp.float32), precision=lax.Precision.HIGHEST) + b_sp
    softsign = sp / (1.0 + jnp.abs(sp))
    a = a + jnp.transpose(softsign, (0, 2, 1))
    out = a * jax.nn.sigmoid(b)
    if residual:
        out = (out + x_nct.astype(jnp.float32)) * math.sqrt(0.5)
    return out


if __name__ == "__main__":
    # TODO(synk): Conv1d.incremental_forward (stateful streaming decode buffer) and
    # training-mode dropout are not implemented; only the eval-mode batch forward is covered.
    def init_params(key, in_channels, out_channels, kernel_size, speaker_embed_dim, dropout):
        k_wc, k_bc, k_wsp = jax.random.split(key, 3)
        fan_in = in_channels * kernel_size
        bound = 1.0 / math.sqrt(fan_in)
        w_conv = jax.random.uniform(k_wc, (2 * out_channels, in_channels, kernel_size),
                                    jnp.float32, -bound, bound)
        b_conv = jax.random.uniform(k_bc, (2 * out_channels,), jnp.float32, -bound, bound)
        # weight-normalized Linear: at init weight == v, so a plain normal weight suffices.
        w_sp = jax.random.normal(k_wsp, (out_channels, speaker_embed_dim), jnp.float32) * \
            math.sqrt((1.0 - dropout) / speaker_embed_dim)
        b_sp = jnp.zeros((out_channels,), jnp.float32)
        return w_conv, b_conv, w_sp, b_sp

    def run_case(key, *, B, T, in_channels, out_channels, E, kernel_size, dilation,
                 causal, residual, time_tile, compute_dtype, rtol, atol):
        k_x, k_sp, k_p = jax.random.split(key, 3)
        x = jax.random.normal(k_x, (B, in_channels, T), jnp.float32)
        sp = jax.random.normal(k_sp, (B, T, E), jnp.float32)
        w_conv, b_conv, w_sp, b_sp = init_params(k_p, in_channels, out_channels,
                                                 kernel_size, E, 0.1)
        out = conv1d_glu(x, sp, w_conv, b_conv, w_sp, b_sp,
                         kernel_size=kernel_size, dilation=dilation, causal=causal,
                         residual=residual, time_tile=time_tile,
                         compute_dtype=compute_dtype)
        out = jax.block_until_ready(out)
        ref = conv1d_glu_reference(x, sp, w_conv, b_conv, w_sp, b_sp,
                                   kernel_size=kernel_size, dilation=dilation,
                                   causal=causal, residual=residual)
        np.testing.assert_allclose(np.asarray(out), np.asarray(ref), rtol=rtol, atol=atol)

    key = jax.random.PRNGKey(0)
    k_a, k_b, k_c, k_d = jax.random.split(key, 4)

    # Tolerances note: the reference conv uses Precision.HIGHEST; the Pallas f32 matmul may
    # run a lower-precision MXU pass, so the "f32" comparison uses a 2e-2 band (still far
    # below any indexing / boundary bug) and the bf16 streaming path uses 6e-2.

    # Config A: module defaults (non-causal, residual, K=3, dil=2), single time tile.
    cfg_a = dict(B=2, T=16, in_channels=8, out_channels=8, E=16, kernel_size=3,
                 dilation=2, causal=False, residual=True, time_tile=None)
    run_case(k_a, **cfg_a, compute_dtype=jnp.float32, rtol=2e-2, atol=2e-2)
    run_case(k_a, **cfg_a, compute_dtype=jnp.bfloat16, rtol=6e-2, atol=6e-2)

    # Config B: longer causal sequence -> multi-tile halo carry + partial final tile.
    cfg_b = dict(B=2, T=320, in_channels=8, out_channels=8, E=16, kernel_size=3,
                 dilation=3, causal=True, residual=True, time_tile=128)
    run_case(k_b, **cfg_b, compute_dtype=jnp.float32, rtol=2e-2, atol=2e-2)
    run_case(k_b, **cfg_b, compute_dtype=jnp.bfloat16, rtol=6e-2, atol=6e-2)

    # Config C: non-causal multi-tile -> halo carry + right-halo lookahead stream.
    cfg_c = dict(B=2, T=300, in_channels=8, out_channels=8, E=16, kernel_size=3,
                 dilation=2, causal=False, residual=True, time_tile=128)
    run_case(k_c, **cfg_c, compute_dtype=jnp.float32, rtol=2e-2, atol=2e-2)

    # Config D: deep dilation (K=5, dil=33) -> second-to-last tile also crosses the sequence end.
    cfg_d = dict(B=1, T=286, in_channels=8, out_channels=8, E=16, kernel_size=5,
                 dilation=33, causal=False, residual=True, time_tile=128)
    run_case(k_d, **cfg_d, compute_dtype=jnp.float32, rtol=2e-2, atol=2e-2)

    print("KERNEL_OK")
</pallas_src>

<mosaic_0001>
module attributes {stable_mosaic.version = 11 : i64} {
  func.func @_conv1d_glu_kernel(%arg0: i32, %arg1: i32, %arg2: memref<1x8x16xf32, #tpu.memory_space<vmem>>, %arg3: memref<1x16x16xf32, #tpu.memory_space<vmem>>, %arg4: memref<3x16x8xf32, #tpu.memory_space<vmem>>, %arg5: memref<16x1xf32, #tpu.memory_space<vmem>>, %arg6: memref<8x16xf32, #tpu.memory_space<vmem>>, %arg7: memref<8x1xf32, #tpu.memory_space<vmem>>, %arg8: memref<1x8x16xf32, #tpu.memory_space<vmem>>, %arg9: memref<8x272xf32, #tpu.memory_space<vmem>>) attributes {dimension_semantics = [#tpu.dimension_semantics<parallel>, #tpu.dimension_semantics<arbitrary>], iteration_bounds = array<i64: 2, 1>, scalar_prefetch = 0 : i64, scratch_operands = 1 : i64, tpu.core_type = #tpu.core_type<tc>, window_params = [{transform_indices = @transform_0, window_bounds = array<i64: 1, 8, 16>}, {transform_indices = @transform_1, window_bounds = array<i64: 1, 16, 16>}, {pipeline_mode = #tpu.pipeline_mode<synchronous>, transform_indices = @transform_2, window_bounds = array<i64: 3, 16, 8>}, {pipeline_mode = #tpu.pipeline_mode<synchronous>, transform_indices = @transform_3, window_bounds = array<i64: 16, 1>}, {pipeline_mode = #tpu.pipeline_mode<synchronous>, transform_indices = @transform_4, window_bounds = array<i64: 8, 16>}, {pipeline_mode = #tpu.pipeline_mode<synchronous>, transform_indices = @transform_5, window_bounds = array<i64: 8, 1>}, {transform_indices = @transform_6, window_bounds = array<i64: 1, 8, 16>}]} {
    %c0_i32 = arith.constant 0 : i32
    %0 = arith.cmpi eq, %arg1, %c0_i32 : i32
    %1 = arith.extui %0 : i1 to i32
    %c0_i32_0 = arith.constant 0 : i32
    %2 = arith.cmpi ne, %1, %c0_i32_0 : i32
    scf.if %2 {
      %cst_38 = arith.constant 0.000000e+00 : f32
      %54 = vector.broadcast %cst_38 : f32 to vector<8x2xf32>
      %c0_39 = arith.constant 0 : index
      %c126_40 = arith.constant 126 : index
      %55 = vector.load %arg9[%c0_39, %c126_40] : memref<8x272xf32, #tpu.memory_space<vmem>>, vector<8x2xf32>
      tpu.vector_store %arg9[%c0_39, %c126_40], %54 {strides = array<i32>} : memref<8x272xf32, #tpu.memory_space<vmem>>, vector<8x2xf32>,
    } else {
    }
    %c0 = arith.constant 0 : index
    %c0_1 = arith.constant 0 : index
    %c0_2 = arith.constant 0 : index
    %3 = vector.load %arg2[%c0, %c0_1, %c0_2] : memref<1x8x16xf32, #tpu.memory_space<vmem>>, vector<1x8x16xf32>
    %4 = vector.shape_cast %3 : vector<1x8x16xf32> to vector<8x16xf32>
    %c0_3 = arith.constant 0 : index
    %c128 = arith.constant 128 : index
    %5 = vector.load %arg9[%c0_3, %c128] : memref<8x272xf32, #tpu.memory_space<vmem>>, vector<8x16xf32>
    tpu.vector_store %arg9[%c0_3, %c128], %4 {strides = array<i32>} : memref<8x272xf32, #tpu.memory_space<vmem>>, vector<8x16xf32>,
    %c0_i32_4 = arith.constant 0 : i32
    %6 = arith.cmpi eq, %arg1, %c0_i32_4 : i32
    %7 = arith.extui %6 : i1 to i32
    %c0_i32_5 = arith.constant 0 : i32
    %8 = arith.cmpi ne, %7, %c0_i32_5 : i32
    scf.if %8 {
      %cst_38 = arith.constant 0.000000e+00 : f32
      %54 = vector.broadcast %cst_38 : f32 to vector<8x2xf32>
      %c0_39 = arith.constant 0 : index
      %c144 = arith.constant 144 : index
      %55 = vector.load %arg9[%c0_39, %c144] : memref<8x272xf32, #tpu.memory_space<vmem>>, vector<8x2xf32>
      tpu.vector_store %arg9[%c0_39, %c144], %54 {strides = array<i32>} : memref<8x272xf32, #tpu.memory_space<vmem>>, vector<8x2xf32>,
    } else {
    }
    %c0_6 = arith.constant 0 : index
    %c0_7 = arith.constant 0 : index
    %c0_8 = arith.constant 0 : index
    %9 = vector.load %arg4[%c0_6, %c0_7, %c0_8] : memref<3x16x8xf32, #tpu.memory_space<vmem>>, vector<1x16x8xf32>
    %10 = vector.shape_cast %9 : vector<1x16x8xf32> to vector<16x8xf32>
    %c0_9 = arith.constant 0 : index
    %c126 = arith.constant 126 : index
    %11 = vector.load %arg9[%c0_9, %c126] : memref<8x272xf32, #tpu.memory_space<vmem>>, vector<8x16xf32>
    %cst = arith.constant dense<0.000000e+00> : vector<16x16xf32>
    %12 = tpu.matmul %10, %11, %cst {dimension_numbers = #tpu.dot_dimension_numbers<[1], [0], [0], [1], [0, 0, 1, 1], [], []>} : vector<16x8xf32>, vector<8x16xf32>, vector<16x16xf32> -> vector<16x16xf32>
    %c1 = arith.constant 1 : index
    %c0_10 = arith.constant 0 : index
    %c0_11 = arith.constant 0 : index
    %13 = vector.load %arg4[%c1, %c0_10, %c0_11] : memref<3x16x8xf32, #tpu.memory_space<vmem>>, vector<1x16x8xf32>
    %14 = vector.shape_cast %13 : vector<1x16x8xf32> to vector<16x8xf32>
    %c0_12 = arith.constant 0 : index
    %c128_13 = arith.constant 128 : index
    %15 = vector.load %arg9[%c0_12, %c128_13] : memref<8x272xf32, #tpu.memory_space<vmem>>, vector<8x16xf32>
    %cst_14 = arith.constant dense<0.000000e+00> : vector<16x16xf32>
    %16 = tpu.matmul %14, %15, %cst_14 {dimension_numbers = #tpu.dot_dimension_numbers<[1], [0], [0], [1], [0, 0, 1, 1], [], []>} : vector<16x8xf32>, vector<8x16xf32>, vector<16x16xf32> -> vector<16x16xf32>
    %17 = arith.addf %12, %16 : vector<16x16xf32>
    %c2 = arith.constant 2 : index
    %c0_15 = arith.constant 0 : index
    %c0_16 = arith.constant 0 : index
    %18 = vector.load %arg4[%c2, %c0_15, %c0_16] : memref<3x16x8xf32, #tpu.memory_space<vmem>>, vector<1x16x8xf32>
    %19 = vector.shape_cast %18 : vector<1x16x8xf32> to vector<16x8xf32>
    %c0_17 = arith.constant 0 : index
    %c130 = arith.constant 130 : index
    %20 = vector.load %arg9[%c0_17, %c130] : memref<8x272xf32, #tpu.memory_space<vmem>>, vector<8x16xf32>
    %cst_18 = arith.constant dense<0.000000e+00> : vector<16x16xf32>
    %21 = tpu.matmul %19, %20, %cst_18 {dimension_numbers = #tpu.dot_dimension_numbers<[1], [0], [0], [1], [0, 0, 1, 1], [], []>} : vector<16x8xf32>, vector<8x16xf32>, vector<16x16xf32> -> vector<16x16xf32>
    %22 = arith.addf %17, %21 : vector<16x16xf32>
    %c0_19 = arith.constant 0 : index
    %c0_20 = arith.constant 0 : index
    %23 = vector.load %arg5[%c0_19, %c0_20] : memref<16x1xf32, #tpu.memory_space<vmem>>, vector<16x1xf32>
    %24 = vector.broadcast %23 : vector<16x1xf32> to vector<16x16xf32>
    %25 = arith.addf %22, %24 : vector<16x16xf32>
    %26 = vector.extract_strided_slice %25 {offsets = [0, 0], sizes = [8, 16], strides = [1, 1]} : vector<16x16xf32> to vector<8x16xf32>
    %27 = vector.extract_strided_slice %25 {offsets = [8, 0], sizes = [8, 16], strides = [1, 1]} : vector<16x16xf32> to vector<8x16xf32>
    %c0_21 = arith.constant 0 : index
    %c0_22 = arith.constant 0 : index
    %28 = vector.load %arg6[%c0_21, %c0_22] : memref<8x16xf32, #tpu.memory_space<vmem>>, vector<8x16xf32>
    %c0_23 = arith.constant 0 : index
    %c0_24 = arith.constant 0 : index
    %c0_25 = arith.constant 0 : index
    %29 = vector.load %arg3[%c0_23, %c0_24, %c0_25] : memref<1x16x16xf32, #tpu.memory_space<vmem>>, vector<1x16x16xf32>
    %30 = vector.shape_cast %29 : vector<1x16x16xf32> to vector<16x16xf32>
    %cst_26 = arith.constant dense<0.000000e+00> : vector<8x16xf32>
    %31 = tpu.matmul %28, %30, %cst_26 {dimension_numbers = #tpu.dot_dimension_numbers<[1], [1], [0], [0], [0, 0, 1, 0], [], []>} : vector<8x16xf32>, vector<16x16xf32>, vector<8x16xf32> -> vector<8x16xf32>
    %c0_27 = arith.constant 0 : index
    %c0_28 = arith.constant 0 : index
    %32 = vector.load %arg7[%c0_27, %c0_28] : memref<8x1xf32, #tpu.memory_space<vmem>>, vector<8x1xf32>
    %33 = vector.broadcast %32 : vector<8x1xf32> to vector<8x16xf32>
    %34 = arith.addf %31, %33 : vector<8x16xf32>
    %35 = math.absf %34 : vector<8x16xf32>
    %cst_29 = arith.constant 1.000000e+00 : f32
    %36 = vector.broadcast %cst_29 : f32 to vector<8x16xf32>
    %37 = arith.addf %36, %35 : vector<8x16xf32>
    %38 = arith.divf %34, %37 : vector<8x16xf32>
    %39 = arith.addf %26, %38 : vector<8x16xf32>
    %40 = arith.negf %27 : vector<8x16xf32>
    %41 = math.exp %40 : vector<8x16xf32>
    %cst_30 = arith.constant 1.000000e+00 : f32
    %42 = vector.broadcast %cst_30 : f32 to vector<8x16xf32>
    %43 = arith.addf %42, %41 : vector<8x16xf32>
    %44 = arith.divf %42, %43 : vector<8x16xf32>
    %45 = arith.mulf %39, %44 : vector<8x16xf32>
    %c0_31 = arith.constant 0 : index
    %c0_32 = arith.constant 0 : index
    %c0_33 = arith.constant 0 : index
    %46 = vector.load %arg2[%c0_31, %c0_32, %c0_33] : memref<1x8x16xf32, #tpu.memory_space<vmem>>, vector<1x8x16xf32>
    %47 = vector.shape_cast %46 : vector<1x8x16xf32> to vector<8x16xf32>
    %48 = arith.addf %45, %47 : vector<8x16xf32>
    %cst_34 = arith.constant 0.707106769 : f32
    %49 = vector.broadcast %cst_34 : f32 to vector<8x16xf32>
    %50 = arith.mulf %48, %49 : vector<8x16xf32>
    %c0_35 = arith.constant 0 : index
    %c0_36 = arith.constant 0 : index
    %c0_37 = arith.constant 0 : index
    %51 = vector.load %arg8[%c0_35, %c0_36, %c0_37] : memref<1x8x16xf32, #tpu.memory_space<vmem>>, vector<1x8x16xf32>
    %52 = vector.shape_cast %51 : vector<1x8x16xf32> to vector<8x16xf32>
    %53 = vector.shape_cast %50 : vector<8x16xf32> to vector<1x8x16xf32>
    tpu.vector_store %arg8[%c0_35, %c0_36, %c0_37], %53 {strides = array<i32>} : memref<1x8x16xf32, #tpu.memory_space<vmem>>, vector<1x8x16xf32>,
    return
  }
  func.func @transform_0(%arg0: i32, %arg1: i32) -> (i32, i32, i32) {
    %c0_i32 = arith.constant 0 : i32
    %c0_i32_0 = arith.constant 0 : i32
    return %arg0, %c0_i32, %arg1 : i32, i32, i32
  }
  func.func @transform_1(%arg0: i32, %arg1: i32) -> (i32, i32, i32) {
    %c0_i32 = arith.constant 0 : i32
    %c0_i32_0 = arith.constant 0 : i32
    return %arg0, %arg1, %c0_i32 : i32, i32, i32
  }
  func.func @transform_2(%arg0: i32, %arg1: i32) -> (i32, i32, i32) {
    %c0_i32 = arith.constant 0 : i32
    %c0_i32_0 = arith.constant 0 : i32
    %c0_i32_1 = arith.constant 0 : i32
    %c0_i32_2 = arith.constant 0 : i32
    return %c0_i32, %c0_i32_0, %c0_i32_1 : i32, i32, i32
  }
  func.func @transform_3(%arg0: i32, %arg1: i32) -> (i32, i32) {
    %c0_i32 = arith.constant 0 : i32
    %c0_i32_0 = arith.constant 0 : i32
    %c0_i32_1 = arith.constant 0 : i32
    return %c0_i32, %c0_i32_0 : i32, i32
  }
  func.func @transform_4(%arg0: i32, %arg1: i32) -> (i32, i32) {
    %c0_i32 = arith.constant 0 : i32
    %c0_i32_0 = arith.constant 0 : i32
    %c0_i32_1 = arith.constant 0 : i32
    return %c0_i32, %c0_i32_0 : i32, i32
  }
  func.func @transform_5(%arg0: i32, %arg1: i32) -> (i32, i32) {
    %c0_i32 = arith.constant 0 : i32
    %c0_i32_0 = arith.constant 0 : i32
    %c0_i32_1 = arith.constant 0 : i32
    return %c0_i32, %c0_i32_0 : i32, i32
  }
  func.func @transform_6(%arg0: i32, %arg1: i32) -> (i32, i32, i32) {
    %c0_i32 = arith.constant 0 : i32
    %c0_i32_0 = arith.constant 0 : i32
    return %arg0, %c0_i32, %arg1 : i32, i32, i32
  }
}

</mosaic_0001>

<llo_original>
// kernel: tpu_custom_call.1
$region0: #{tpu_custom_call.1}
  #allocation0 [shape = 'u32[]', space=smem, size = 0x4, offset = 0x4, fixed_abs, tag = 'smem constant byte address 0x4 - core index']
  #allocation1 [shape = 'u32[144,128]{1,0:T(1,128)}', space=vmem, size = 0x12000, scoped, tag = 'internal scratch']
  #allocation2 [shape = 'f32[8,272]{1,0:T(8,128)}', space=vmem, size = 0x3000, scoped, tag = 'scratch operand']
  %s0 = inlined_call_operand.vmem [shape: f32[2,8,16], index: 0, kind: input, shape index: {}]
  %s1 = inlined_call_operand.vmem [shape: f32[2,16,16], index: 1, kind: input, shape index: {}]
  %s2 = inlined_call_operand.vmem [shape: f32[3,16,8], index: 2, kind: input, shape index: {}]
  %s3 = inlined_call_operand.vmem [shape: f32[16,1], index: 3, kind: input, shape index: {}]
  %s4 = inlined_call_operand.vmem [shape: f32[8,16], index: 4, kind: input, shape index: {}]
  %s5 = inlined_call_operand.vmem [shape: f32[8,1], index: 5, kind: input, shape index: {}]
  %s6 = inlined_call_operand.hbm [shape: f32[2,8,16], index: 6, kind: output, shape index: {}]
  %s7 = sld [smem:[#allocation0]]
  $region65: #{tpu_custom_call.1} parent=0
    _
  %s9 = ssub.s32 1, %s7
  %s10 = scalar_select 0, %s9, %s7
  $region1: #{tpu_custom_call.1} parent=0
    #allocation3 [shape = 'u8[8192]{0}', space=vmem, size = 0x2000, scoped, tag = 'output window, operand 0']
    #allocation4 [shape = 's32[2]{0}', space=sflag, size = 0x8, scoped, tag = 'scoped memory for tpu_custom_call.1']
    %11 = vsyncpa [#allocation4], 0
    %s12 = scalar_lea.sflag [#allocation4], 1
    %13 = vsyncpa %s12, 0
    loop: start=0, step=1, limit=4
    $region2: #{tpu_custom_call.1} parent=1 // loop_pre_header
      _
    $region3: #{tpu_custom_call.1} parent=1 // loop_header
      %s15 = sphi 0, %s19
      %p16 = scmp.ge.s32.totalorder %s15, 4
      %s22 = sphi 0, %s34
      %s23 = sphi 0, %s30
      %s24 = sphi 0, %s22
      %s25 = sphi 0, %s23
      %s26 = sphi 0, %s24
      %s27 = sphi 0, %s25
      %s39 = sphi 0, %s41
      %s42 = sphi 0, %s39
      %s43 = sphi 0, %s42
      %s59 = sphi 0, %s43
      %s67 = sphi 0, %s69
      %s70 = sphi 0, %s67
      %s71 = sphi 0, %s70
      %s87 = sphi 0, %s71
      %s91 = sphi 0, %s91
      %s93 = sphi 0, %s91
      %s94 = sphi 0, %s93
      %s108 = sphi 0, %s94
      %s112 = sphi 0, %s112
      %s114 = sphi 0, %s112
      %s115 = sphi 0, %s114
      %s129 = sphi 0, %s115
      %s133 = sphi 0, %s133
      %s135 = sphi 0, %s133
      %s136 = sphi 0, %s135
      %s150 = sphi 0, %s136
      %s154 = sphi 0, %s154
      %s156 = sphi 0, %s154
      %s157 = sphi 0, %s156
      %s171 = sphi 0, %s157
      %s179 = sphi 0, %s181
      %s182 = sphi 0, %s179
      %s183 = sphi 0, %s182
      %s199 = sphi 0, %s183
    $region4: #{tpu_custom_call.1} parent=1 // loop_header_branch
      %18 = sbr.rel (%p16) target = $region8
    $region5: #{tpu_custom_call.1} parent=1 // loop_body
      %s20 = ssub.s32 %s15, 1
      %s21 = ssub.s32 %s15, 2
      %s28 = sadd.s32 1, %s23
      %p29 = scmp.ge.s32.totalorder %s28, 1
      %s30 = scalar_select %p29, 0, %s28
      %s31 = sadd.s32 1, %s22
      %s32 = scalar_select %p29, %s31, %s22
      %p33 = scmp.ge.s32.totalorder %s32, 2
      %s34 = scalar_select %p33, 0, %s32
      %s35 = ssub.s32 %s22, %s34
      %s36 = ssub.s32 %s23, %s30
      %s37 = sor.u32 %s35, %s36
      %p38 = scmp.eq.s32.totalorder %s37, 0
      %s40 = sadd.s32 %s39, 1
      %s41 = scalar_select %p38, %s39, %s40
      %p44 = pneg %p38
      %p45 = scmp.eq.s32.totalorder %s15, 1
      %p46 = por %p44, %p45
      %p47 = scmp.ne.s32.totalorder %s39, %s42
      %p48 = scmp.eq.s32.totalorder %s15, 0
      %p49 = por %p47, %p48
      %p50 = scmp.ne.s32.totalorder %s39, %s42
      %p51 = scmp.eq.s32.totalorder %s20, 1
      %p52 = por %p50, %p51
      %p53 = scmp.ne.s32.totalorder %s42, %s43
      %p54 = scmp.eq.s32.totalorder %s20, 0
      %p55 = por %p53, %p54
      %p56 = scmp.ne.s32.totalorder %s42, %s43
      %p57 = scmp.eq.s32.totalorder %s21, 1
      %p58 = por %p56, %p57
      %p60 = scmp.ne.s32.totalorder %s43, %s59
      %p61 = scmp.eq.s32.totalorder %s21, 0
      %p62 = por %p60, %p61
      %s63 = ssub.s32 %s22, %s34
      %s64 = ssub.s32 %s23, %s30
      %s65 = sor.u32 %s63, %s64
      %p66 = scmp.eq.s32.totalorder %s65, 0
      %s68 = sadd.s32 %s67, 1
      %s69 = scalar_select %p66, %s67, %s68
      %p72 = pneg %p66
      %p73 = scmp.eq.s32.totalorder %s15, 1
      %p74 = por %p72, %p73
      %p75 = scmp.ne.s32.totalorder %s67, %s70
      %p76 = scmp.eq.s32.totalorder %s15, 0
      %p77 = por %p75, %p76
      %p78 = scmp.ne.s32.totalorder %s67, %s70
      %p79 = scmp.eq.s32.totalorder %s20, 1
      %p80 = por %p78, %p79
      %p81 = scmp.ne.s32.totalorder %s70, %s71
      %p82 = scmp.eq.s32.totalorder %s20, 0
      %p83 = por %p81, %p82
      %p84 = scmp.ne.s32.totalorder %s70, %s71
      %p85 = scmp.eq.s32.totalorder %s21, 1
      %p86 = por %p84, %p85
      %p88 = scmp.ne.s32.totalorder %s71, %s87
      %p89 = scmp.eq.s32.totalorder %s21, 0
      %p90 = por %p88, %p89
      %s92 = sadd.s32 %s91, 1
      %p95 = scmp.eq.s32.totalorder %s15, 1
      %p96 = scmp.ne.s32.totalorder %s91, %s93
      %p97 = scmp.eq.s32.totalorder %s15, 0
      %p98 = por %p96, %p97
      %p99 = scmp.ne.s32.totalorder %s91, %s93
      %p100 = scmp.eq.s32.totalorder %s20, 1
      %p101 = por %p99, %p100
      %p102 = scmp.ne.s32.totalorder %s93, %s94
      %p103 = scmp.eq.s32.totalorder %s20, 0
      %p104 = por %p102, %p103
      %p105 = scmp.ne.s32.totalorder %s93, %s94
      %p106 = scmp.eq.s32.totalorder %s21, 1
      %p107 = por %p105, %p106
      %p109 = scmp.ne.s32.totalorder %s94, %s108
      %p110 = scmp.eq.s32.totalorder %s21, 0
      %p111 = por %p109, %p110
      %s113 = sadd.s32 %s112, 1
      %p116 = scmp.eq.s32.totalorder %s15, 1
      %p117 = scmp.ne.s32.totalorder %s112, %s114
      %p118 = scmp.eq.s32.totalorder %s15, 0
      %p119 = por %p117, %p118
      %p120 = scmp.ne.s32.totalorder %s112, %s114
      %p121 = scmp.eq.s32.totalorder %s20, 1
      %p122 = por %p120, %p121
      %p123 = scmp.ne.s32.totalorder %s114, %s115
      %p124 = scmp.eq.s32.totalorder %s20, 0
      %p125 = por %p123, %p124
      %p126 = scmp.ne.s32.totalorder %s114, %s115
      %p127 = scmp.eq.s32.totalorder %s21, 1
      %p128 = por %p126, %p127
      %p130 = scmp.ne.s32.totalorder %s115, %s129
      %p131 = scmp.eq.s32.totalorder %s21, 0
      %p132 = por %p130, %p131
      %s134 = sadd.s32 %s133, 1
      %p137 = scmp.eq.s32.totalorder %s15, 1
      %p138 = scmp.ne.s32.totalorder %s133, %s135
      %p139 = scmp.eq.s32.totalorder %s15, 0
      %p140 = por %p138, %p139
      %p141 = scmp.ne.s32.totalorder %s133, %s135
      %p142 = scmp.eq.s32.totalorder %s20, 1
      %p143 = por %p141, %p142
      %p144 = scmp.ne.s32.totalorder %s135, %s136
      %p145 = scmp.eq.s32.totalorder %s20, 0
      %p146 = por %p144, %p145
      %p147 = scmp.ne.s32.totalorder %s135, %s136
      %p148 = scmp.eq.s32.totalorder %s21, 1
      %p149 = por %p147, %p148
      %p151 = scmp.ne.s32.totalorder %s136, %s150
      %p152 = scmp.eq.s32.totalorder %s21, 0
      %p153 = por %p151, %p152
      %s155 = sadd.s32 %s154, 1
      %p158 = scmp.eq.s32.totalorder %s15, 1
      %p159 = scmp.ne.s32.totalorder %s154, %s156
      %p160 = scmp.eq.s32.totalorder %s15, 0
      %p161 = por %p159, %p160
      %p162 = scmp.ne.s32.totalorder %s154, %s156
      %p163 = scmp.eq.s32.totalorder %s20, 1
      %p164 = por %p162, %p163
      %p165 = scmp.ne.s32.totalorder %s156, %s157
      %p166 = scmp.eq.s32.totalorder %s20, 0
      %p167 = por %p165, %p166
      %p168 = scmp.ne.s32.totalorder %s156, %s157
      %p169 = scmp.eq.s32.totalorder %s21, 1
      %p170 = por %p168, %p169
      %p172 = scmp.ne.s32.totalorder %s157, %s171
      %p173 = scmp.eq.s32.totalorder %s21, 0
      %p174 = por %p172, %p173
      %s175 = ssub.s32 %s22, %s34
      %s176 = ssub.s32 %s23, %s30
      %s177 = sor.u32 %s175, %s176
      %p178 = scmp.eq.s32.totalorder %s177, 0
      %s180 = sadd.s32 %s179, 1
      %s181 = scalar_select %p178, %s179, %s180
      %p184 = pneg %p178
      %p185 = scmp.eq.s32.totalorder %s15, 1
      %p186 = por %p184, %p185
      %p187 = scmp.ne.s32.totalorder %s179, %s182
      %p188 = scmp.eq.s32.totalorder %s15, 0
      %p189 = por %p187, %p188
      %p190 = scmp.ne.s32.totalorder %s179, %s182
      %p191 = scmp.eq.s32.totalorder %s20, 1
      %p192 = por %p190, %p191
      %p193 = scmp.ne.s32.totalorder %s182, %s183
      %p194 = scmp.eq.s32.totalorder %s20, 0
      %p195 = por %p193, %p194
      %p196 = scmp.ne.s32.totalorder %s182, %s183
      %p197 = scmp.eq.s32.totalorder %s21, 1
      %p198 = por %p196, %p197
      %p200 = scmp.ne.s32.totalorder %s183, %s199
      %p201 = scmp.eq.s32.totalorder %s21, 0
      %p202 = por %p200, %p201
      %p203 = scmp.le.s32.totalorder 1, %s15
      %p204 = scmp.lt.s32.totalorder %s15, 3
      %p205 = pnand %p203, %p204
      %p206 = pneg %p205
      // Predicated region
      $region9: #{tpu_custom_call.1} parent=5 // pred_check
        _
      $region10: #{tpu_custom_call.1} parent=5 // pred_check_branch
        %208 = sbr.rel (%p205) target = $region12
      $region11: #{tpu_custom_call.1} parent=5 // pred_region
        %s209 = ssub.s32 %s15, 1
        // Predicated region
        $region13: #{tpu_custom_call.1} parent=11 // pred_check
          %p210 = pneg %p104
        $region14: #{tpu_custom_call.1} parent=11 // pred_check_branch
          %212 = sbr.rel (%p210) target = $region16
        $region15: #{tpu_custom_call.1} parent=11 // pred_region
          _
        $region16: #{tpu_custom_call.1} parent=11 // pred_fallthru
          _
        // Predicated region
        $region17: #{tpu_custom_call.1} parent=11 // pred_check
          %p213 = pneg %p125
        $region18: #{tpu_custom_call.1} parent=11 // pred_check_branch
          %215 = sbr.rel (%p213) target = $region20
        $region19: #{tpu_custom_call.1} parent=11 // pred_region
          _
        $region20: #{tpu_custom_call.1} parent=11 // pred_fallthru
          _
        // Predicated region
        $region21: #{tpu_custom_call.1} parent=11 // pred_check
          %p216 = pneg %p146
        $region22: #{tpu_custom_call.1} parent=11 // pred_check_branch
          %218 = sbr.rel (%p216) target = $region24
        $region23: #{tpu_custom_call.1} parent=11 // pred_region
          _
        $region24: #{tpu_custom_call.1} parent=11 // pred_fallthru
          _
        // Predicated region
        $region25: #{tpu_custom_call.1} parent=11 // pred_check
          %p219 = pneg %p167
        $region26: #{tpu_custom_call.1} parent=11 // pred_check_branch
          %221 = sbr.rel (%p219) target = $region28
        $region27: #{tpu_custom_call.1} parent=11 // pred_region
          _
        $region28: #{tpu_custom_call.1} parent=11 // pred_fallthru
          _
      $region12: #{tpu_custom_call.1} parent=5 // pred_fallthru
        _
      %p222 = scmp.lt.s32.totalorder %s15, 2
      // Predicated region
      $region29: #{tpu_custom_call.1} parent=5 // pred_check
        %p223 = pneg %p222
      $region30: #{tpu_custom_call.1} parent=5 // pred_check_branch
        %225 = sbr.rel (%p223) target = $region32
      $region31: #{tpu_custom_call.1} parent=5 // pred_region
        // Predicated region
        $region33: #{tpu_custom_call.1} parent=31 // pred_check
          %p226 = pneg %p49
        $region34: #{tpu_custom_call.1} parent=31 // pred_check_branch
          %228 = sbr.rel (%p226) target = $region36
        $region35: #{tpu_custom_call.1} parent=31 // pred_region
          %p229 = scmp.lt.s32.totalorder %s22, 1
          %s230 = scalar_select %p229, %s22, 1
          %p231 = scmp.lt.s32.totalorder %s23, 0
          %s232 = scalar_select %p231, %s23, 0
          %s233 = sadd.s32 %s232, %s230
          %s234 = smul.addr %s233, 8
          %s235 = scalar_lea.vmem %s0, %s234
        $region36: #{tpu_custom_call.1} parent=31 // pred_fallthru
          _
        // Predicated region
        $region37: #{tpu_custom_call.1} parent=31 // pred_check
          %p236 = pneg %p77
        $region38: #{tpu_custom_call.1} parent=31 // pred_check_branch
          %238 = sbr.rel (%p236) target = $region40
        $region39: #{tpu_custom_call.1} parent=31 // pred_region
          %s239 = smul.u32 2, %s23
          %p240 = scmp.lt.s32.totalorder %s22, 1
          %s241 = scalar_select %p240, %s22, 1
          %p242 = scmp.lt.s32.totalorder %s239, 1
          %s243 = scalar_select %p242, %s239, 1
          %s244 = smul.addr %s241, 2
          %s245 = sadd.s32 %s243, %s244
          %s246 = smul.addr %s245, 8
          %s247 = scalar_lea.vmem %s1, %s246
          %s248 = smul.u32 2, %s23
        $region40: #{tpu_custom_call.1} parent=31 // pred_fallthru
          _
      $region32: #{tpu_custom_call.1} parent=5 // pred_fallthru
        _
      %p249 = scmp.le.s32.totalorder 1, %s15
      %p250 = scmp.lt.s32.totalorder %s15, 3
      %p251 = pnand %p249, %p250
      %p252 = pneg %p251
      // Predicated region
      $region41: #{tpu_custom_call.1} parent=5 // pred_check
        _
      $region42: #{tpu_custom_call.1} parent=5 // pred_check_branch
        %254 = sbr.rel (%p251) target = $region44
      $region43: #{tpu_custom_call.1} parent=5 // pred_region
        %s255 = ssub.s32 %s15, 1
        %p256 = scmp.lt.s32.totalorder %s24, 1
        %s257 = scalar_select %p256, %s24, 1
        %p258 = scmp.lt.s32.totalorder %s25, 0
        %s259 = scalar_select %p258, %s25, 0
        %s260 = sadd.s32 %s259, %s257
        %s261 = smul.addr %s260, 8
        %s262 = scalar_lea.vmem %s0, %s261
        %p263 = pneg %p55
        %p264 = pneg %p52
        %s265 = smul.u32 2, %s25
        %p266 = scmp.lt.s32.totalorder %s24, 1
        %s267 = scalar_select %p266, %s24, 1
        %p268 = scmp.lt.s32.totalorder %s265, 1
        %s269 = scalar_select %p268, %s265, 1
        %s270 = smul.addr %s267, 2
        %s271 = sadd.s32 %s269, %s270
        %s272 = smul.addr %s271, 8
        %s273 = scalar_lea.vmem %s1, %s272
        %p274 = pneg %p83
        %p275 = pneg %p80
        %p276 = pneg %p104
        %p277 = pneg %p101
        %p278 = pneg %p125
        %p279 = pneg %p122
        %p280 = pneg %p146
        %p281 = pneg %p143
        %p282 = pneg %p167
        %p283 = pneg %p164
        %p284 = pneg %p195
        %p285 = pneg %p192
        %s286 = sand.u32 %s182, 1
        %s287 = scalar_lea.sflag [#allocation4], %s286
        %s288 = sand.u32 %s182, 1
        %s289 = smul.addr %s288, 8
        %s290 = scalar_lea.vmem [#allocation3], %s289
        %p291 = scmp.lt.s32.totalorder %s24, 1
        %s292 = scalar_select %p291, %s24, 1
        %p293 = scmp.lt.s32.totalorder %s25, 0
        %s294 = scalar_select %p293, %s25, 0
        %s295 = sadd.s32 %s294, %s292
        %s296 = smul.addr %s295, 8
        %s297 = scalar_lea.vmem %s0, %s296
        %s298 = smul.u32 2, %s25
        %p299 = scmp.lt.s32.totalorder %s24, 1
        %s300 = scalar_select %p299, %s24, 1
        %p301 = scmp.lt.s32.totalorder %s298, 1
        %s302 = scalar_select %p301, %s298, 1
        %s303 = smul.addr %s300, 2
        %s304 = sadd.s32 %s302, %s303
        %s305 = smul.addr %s304, 8
        %s306 = scalar_lea.vmem %s1, %s305
        %s307 = smul.u32 2, %s25
        %p308 = scmp.eq.s32.totalorder %s25, 0
        // Predicated region
        $region45: #{tpu_custom_call.1} parent=43 // pred_check
          %p309 = pneg %p308
        $region46: #{tpu_custom_call.1} parent=43 // pred_check_branch
          %311 = sbr.rel (%p309) target = $region48
        $region47: #{tpu_custom_call.1} parent=43 // pred_region
          %vm312 = vcmask 1048560
          %313 = vst.msk [vmem:[#allocation2] sm:$0xff] %vm312, 0.0
        $region48: #{tpu_custom_call.1} parent=43 // pred_fallthru
          _
        %v314 = vld [vmem:[%s297] sm:$0xff]
        %vm315 = vcmask 130048
        %316 = vst.msk [vmem:[#allocation2 + $0x8] sm:$0xff] %vm315, %v314
        // Predicated region
        $region49: #{tpu_custom_call.1} parent=43 // pred_check
          %p317 = pneg %p308
        $region50: #{tpu_custom_call.1} parent=43 // pred_check_branch
          %319 = sbr.rel (%p317) target = $region52
        $region51: #{tpu_custom_call.1} parent=43 // pred_region
          %vm320 = vcmask 146560
          %321 = vst.msk [vmem:[#allocation2 + $0x8] sm:$0xff] %vm320, 0.0
        $region52: #{tpu_custom_call.1} parent=43 // pred_fallthru
          _
        %v322 = vld [vmem:[%s2] sm:$0xff]
        %v323 = vld [vmem:[%s2 + $0x8] sm:$0xff]
        %v324 = vld [vmem:[#allocation2] sm:$0xff]
        %v325 = vld [vmem:[#allocation2 + $0x8] sm:$0xff]
        %s326 = scalar_lea.vmem %s2, 16
        %v327 = vld [vmem:[%s326] sm:$0xff]
        %v328 = vld [vmem:[%s326 + $0x8] sm:$0xff]
        %vm329 = vcmask 64512
        %v331 = vsel %vm329, %v327, 0
        %v334 = vsel %vm329, %v328, 0
        %336 = vmatprep.subr.mxu0 0.0
        %337 = vmatpush1.msra.mxu0 %v325
        %338 = vmatprep.subr.mxu0 0.0
        %339 = vmatpush1.msra.mxu0 0.0
        %340 = vmatprep.subr.mxu0 0.0
        %341 = vmatpush1.msra.mxu0 0.0
        %342 = vmatprep.subr.mxu0 0.0
        %343 = vmatpush1.msra.mxu0 0.0
        %344 = vmatprep.subr.mxu0 0.0
        %345 = vmatpush1.msra.mxu0 0.0
        %346 = vmatprep.subr.mxu0 0.0
        %347 = vmatpush1.msra.mxu0 0.0
        %348 = vmatprep.subr.mxu0 0.0
        %349 = vmatpush1.msra.mxu0 0.0
        %350 = vmatprep.subr.mxu0 0.0
        %351 = vmatpush1.msra.mxu0 0.0
        %352 = vmatprep.subr.mxu0 0.0
        %353 = vmatpush1.msra.mxu0 0.0
        %354 = vmatprep.subr.mxu0 0.0
        %355 = vmatpush1.msra.mxu0 0.0
        %356 = vmatprep.subr.mxu0 0.0
        %357 = vmatpush1.msra.mxu0 0.0
        %358 = vmatprep.subr.mxu0 0.0
        %359 = vmatpush1.msra.mxu0 0.0
        %360 = vmatprep.subr.mxu0 0.0
        %361 = vmatpush1.msra.mxu0 0.0
        %362 = vmatprep.subr.mxu0 0.0
        %363 = vmatpush1.msra.mxu0 0.0
        %364 = vmatprep.subr.mxu0 0.0
        %365 = vmatpush1.msra.mxu0 0.0
        %366 = vmatprep.subr.mxu0 0.0
        %367 = vmatpush1.msra.mxu0 0.0
        %368 = vmatprep.subr.mxu0 0.0
        %369 = vmatpush1.msra.mxu0 0.0
        %370 = vmatprep.subr.mxu0 0.0
        %371 = vmatpush1.msra.mxu0 0.0
        %372 = vmatprep.subr.mxu0 0.0
        %373 = vmatpush1.msra.mxu0 0.0
        %374 = vmatprep.subr.mxu0 0.0
        %375 = vmatpush1.msra.mxu0 0.0
        %376 = vmatprep.subr.mxu0 0.0
        %377 = vmatpush1.msra.mxu0 0.0
        %378 = vmatprep.subr.mxu0 0.0
        %379 = vmatpush1.msra.mxu0 0.0
        %380 = vmatprep.subr.mxu0 0.0
        %381 = vmatpush1.msra.mxu0 0.0
        %382 = vmatprep.subr.mxu0 0.0
        %383 = vmatpush1.msra.mxu0 0.0
        %384 = vmatprep.subr.mxu0 0.0
        %385 = vmatpush1.msra.mxu0 0.0
        %386 = vmatprep.subr.mxu0 0.0
        %387 = vmatpush1.msra.mxu0 0.0
        %388 = vmatprep.subr.mxu0 0.0
        %389 = vmatpush1.msra.mxu0 0.0
        %390 = vmatprep.subr.mxu0 0.0
        %391 = vmatpush1.msra.mxu0 0.0
        %392 = vmatprep.subr.mxu0 0.0
        %393 = vmatpush1.msra.mxu0 0.0
        %394 = vmatprep.subr.mxu0 0.0
        %395 = vmatpush1.msra.mxu0 0.0
        %396 = vmatprep.subr.mxu0 0.0
        %397 = vmatpush1.msra.mxu0 0.0
        %398 = vmatprep.subr.mxu0 0.0
        %399 = vmatpush1.msra.mxu0 0.0
        %400 = vmatprep.mubr.f32.mxu0 0.0
        %401 = vmatmul.mubr.f32.gmra.mrb[0].mxu0 %v331
        %v402 = vpop.f32.mrb[0].mxu0
        %v403 = vadd.f32 0.0, %v402
        %v404 = vpop.f32.mrb[0].mxu0
        %405 = vmatprep.mubr.f32.mxu0 0.0
        %406 = vmatmul.mubr.f32.gmra.mrb[0].mxu0 %v334
        %v407 = vpop.f32.mrb[0].mxu0
        %v408 = vadd.f32 0.0, %v407
        %v409 = vpop.f32.mrb[0].mxu0
        %410 = vdwg.mxu0
        %413 = vrot.lane.b32.xlu0 %v324, 2
        %v414 = vpop.permute.xlu0 %413
        %415 = vrot.lane.b32.xlu0 %v325, 2
        %v416 = vpop.permute.xlu0 %415
        %vm417 = vcmask 15360
        %v418 = vsel %vm417, %v414, %v416
        %v421 = vsel %vm329, %v322, 0
        %v424 = vsel %vm329, %v323, 0
        %426 = vmatprep.subr.mxu0 0.0
        %427 = vmatpush1.msra.mxu0 %v418
        %428 = vmatprep.subr.mxu0 0.0
        %429 = vmatpush1.msra.mxu0 0.0
        %430 = vmatprep.subr.mxu0 0.0
        %431 = vmatpush1.msra.mxu0 0.0
        %432 = vmatprep.subr.mxu0 0.0
        %433 = vmatpush1.msra.mxu0 0.0
        %434 = vmatprep.subr.mxu0 0.0
        %435 = vmatpush1.msra.mxu0 0.0
        %436 = vmatprep.subr.mxu0 0.0
        %437 = vmatpush1.msra.mxu0 0.0
        %438 = vmatprep.subr.mxu0 0.0
        %439 = vmatpush1.msra.mxu0 0.0
        %440 = vmatprep.subr.mxu0 0.0
        %441 = vmatpush1.msra.mxu0 0.0
        %442 = vmatprep.subr.mxu0 0.0
        %443 = vmatpush1.msra.mxu0 0.0
        %444 = vmatprep.subr.mxu0 0.0
        %445 = vmatpush1.msra.mxu0 0.0
        %446 = vmatprep.subr.mxu0 0.0
        %447 = vmatpush1.msra.mxu0 0.0
        %448 = vmatprep.subr.mxu0 0.0
        %449 = vmatpush1.msra.mxu0 0.0
        %450 = vmatprep.subr.mxu0 0.0
        %451 = vmatpush1.msra.mxu0 0.0
        %452 = vmatprep.subr.mxu0 0.0
        %453 = vmatpush1.msra.mxu0 0.0
        %454 = vmatprep.subr.mxu0 0.0
        %455 = vmatpush1.msra.mxu0 0.0
        %456 = vmatprep.subr.mxu0 0.0
        %457 = vmatpush1.msra.mxu0 0.0
        %458 = vmatprep.subr.mxu0 0.0
        %459 = vmatpush1.msra.mxu0 0.0
        %460 = vmatprep.subr.mxu0 0.0
        %461 = vmatpush1.msra.mxu0 0.0
        %462 = vmatprep.subr.mxu0 0.0
        %463 = vmatpush1.msra.mxu0 0.0
        %464 = vmatprep.subr.mxu0 0.0
        %465 = vmatpush1.msra.mxu0 0.0
        %466 = vmatprep.subr.mxu0 0.0
        %467 = vmatpush1.msra.mxu0 0.0
        %468 = vmatprep.subr.mxu0 0.0
        %469 = vmatpush1.msra.mxu0 0.0
        %470 = vmatprep.subr.mxu0 0.0
        %471 = vmatpush1.msra.mxu0 0.0
        %472 = vmatprep.subr.mxu0 0.0
        %473 = vmatpush1.msra.mxu0 0.0
        %474 = vmatprep.subr.mxu0 0.0
        %475 = vmatpush1.msra.mxu0 0.0
        %476 = vmatprep.subr.mxu0 0.0
        %477 = vmatpush1.msra.mxu0 0.0
        %478 = vmatprep.subr.mxu0 0.0
        %479 = vmatpush1.msra.mxu0 0.0
        %480 = vmatprep.subr.mxu0 0.0
        %481 = vmatpush1.msra.mxu0 0.0
        %482 = vmatprep.subr.mxu0 0.0
        %483 = vmatpush1.msra.mxu0 0.0
        %484 = vmatprep.subr.mxu0 0.0
        %485 = vmatpush1.msra.mxu0 0.0
        %486 = vmatprep.subr.mxu0 0.0
        %487 = vmatpush1.msra.mxu0 0.0
        %488 = vmatprep.subr.mxu0 0.0
        %489 = vmatpush1.msra.mxu0 0.0
        %490 = vmatprep.mubr.f32.mxu0 0.0
        %491 = vmatmul.mubr.f32.gmra.mrb[0].mxu0 %v421
        %v492 = vpop.f32.mrb[0].mxu0
        %v493 = vadd.f32 %v403, %v492
        %v494 = vpop.f32.mrb[0].mxu0
        %495 = vmatprep.mubr.f32.mxu0 0.0
        %496 = vmatmul.mubr.f32.gmra.mrb[0].mxu0 %v424
        %v497 = vpop.f32.mrb[0].mxu0
        %v498 = vadd.f32 %v408, %v497
        %v499 = vpop.f32.mrb[0].mxu0
        %500 = vdwg.mxu0
        %s501 = scalar_lea.vmem %s2, 32
        %v502 = vld [vmem:[%s501] sm:$0xff]
        %v503 = vld [vmem:[%s501 + $0x8] sm:$0xff]
        %504 = vrot.lane.b32.xlu0 %v325, 126
        %v505 = vpop.permute.xlu0 %504
        %v508 = vsel %vm329, %v502, 0
        %v511 = vsel %vm329, %v503, 0
        %513 = vmatprep.subr.mxu0 0.0
        %514 = vmatpush1.msra.mxu0 %v505
        %515 = vmatprep.subr.mxu0 0.0
        %516 = vmatpush1.msra.mxu0 0.0
        %517 = vmatprep.subr.mxu0 0.0
        %518 = vmatpush1.msra.mxu0 0.0
        %519 = vmatprep.subr.mxu0 0.0
        %520 = vmatpush1.msra.mxu0 0.0
        %521 = vmatprep.subr.mxu0 0.0
        %522 = vmatpush1.msra.mxu0 0.0
        %523 = vmatprep.subr.mxu0 0.0
        %524 = vmatpush1.msra.mxu0 0.0
        %525 = vmatprep.subr.mxu0 0.0
        %526 = vmatpush1.msra.mxu0 0.0
        %527 = vmatprep.subr.mxu0 0.0
        %528 = vmatpush1.msra.mxu0 0.0
        %529 = vmatprep.subr.mxu0 0.0
        %530 = vmatpush1.msra.mxu0 0.0
        %531 = vmatprep.subr.mxu0 0.0
        %532 = vmatpush1.msra.mxu0 0.0
        %533 = vmatprep.subr.mxu0 0.0
        %534 = vmatpush1.msra.mxu0 0.0
        %535 = vmatprep.subr.mxu0 0.0
        %536 = vmatpush1.msra.mxu0 0.0
        %537 = vmatprep.subr.mxu0 0.0
        %538 = vmatpush1.msra.mxu0 0.0
        %539 = vmatprep.subr.mxu0 0.0
        %540 = vmatpush1.msra.mxu0 0.0
        %541 = vmatprep.subr.mxu0 0.0
        %542 = vmatpush1.msra.mxu0 0.0
        %543 = vmatprep.subr.mxu0 0.0
        %544 = vmatpush1.msra.mxu0 0.0
        %545 = vmatprep.subr.mxu0 0.0
        %546 = vmatpush1.msra.mxu0 0.0
        %547 = vmatprep.subr.mxu0 0.0
        %548 = vmatpush1.msra.mxu0 0.0
        %549 = vmatprep.subr.mxu0 0.0
        %550 = vmatpush1.msra.mxu0 0.0
        %551 = vmatprep.subr.mxu0 0.0
        %552 = vmatpush1.msra.mxu0 0.0
        %553 = vmatprep.subr.mxu0 0.0
        %554 = vmatpush1.msra.mxu0 0.0
        %555 = vmatprep.subr.mxu0 0.0
        %556 = vmatpush1.msra.mxu0 0.0
        %557 = vmatprep.subr.mxu0 0.0
        %558 = vmatpush1.msra.mxu0 0.0
        %559 = vmatprep.subr.mxu0 0.0
        %560 = vmatpush1.msra.mxu0 0.0
        %561 = vmatprep.subr.mxu0 0.0
        %562 = vmatpush1.msra.mxu0 0.0
        %563 = vmatprep.subr.mxu0 0.0
        %564 = vmatpush1.msra.mxu0 0.0
        %565 = vmatprep.subr.mxu0 0.0
        %566 = vmatpush1.msra.mxu0 0.0
        %567 = vmatprep.subr.mxu0 0.0
        %568 = vmatpush1.msra.mxu0 0.0
        %569 = vmatprep.subr.mxu0 0.0
        %570 = vmatpush1.msra.mxu0 0.0
        %571 = vmatprep.subr.mxu0 0.0
        %572 = vmatpush1.msra.mxu0 0.0
        %573 = vmatprep.subr.mxu0 0.0
        %574 = vmatpush1.msra.mxu0 0.0
        %575 = vmatprep.subr.mxu0 0.0
        %576 = vmatpush1.msra.mxu0 0.0
        %577 = vmatprep.mubr.f32.mxu0 0.0
        %578 = vmatmul.mubr.f32.gmra.mrb[0].mxu0 %v508
        %v579 = vpop.f32.mrb[0].mxu0
        %v580 = vadd.f32 0.0, %v579
        %v581 = vpop.f32.mrb[0].mxu0
        %582 = vmatprep.mubr.f32.mxu0 0.0
        %583 = vmatmul.mubr.f32.gmra.mrb[0].mxu0 %v511
        %v584 = vpop.f32.mrb[0].mxu0
        %v585 = vadd.f32 0.0, %v584
        %v586 = vpop.f32.mrb[0].mxu0
        %587 = vdwg.mxu0
        %v588 = vadd.f32 %v493, %v580
        %v589 = vadd.f32 %v498, %v585
        %v590 = vld [vmem:[%s3] sm:$0xff]
        %v591 = vld [vmem:[%s3 + $0x8] sm:$0xff]
        %593 = vset.pattern.permute.xlu0 0
        %594 = vperm.xlu0 %593, %v590
        %v595 = vpop.permute.xlu0 %594
        %598 = vset.pattern.permute.xlu0 0
        %599 = vperm.xlu0 %598, %v591
        %v600 = vpop.permute.xlu0 %599
        %v602 = vadd.f32 %v588, %v595
        %v603 = vadd.f32 %v589, %v600
        %v604 = vld [vmem:[%s4] sm:$0xff]
        %v605 = vld [vmem:[%s306] sm:$0xff]
        %v606 = vld [vmem:[%s306 + $0x8] sm:$0xff]
        %v607 = vld [vmem:[%s5] sm:$0xff]
        %609 = vset.pattern.permute.xlu0 0
        %610 = vperm.xlu0 %609, %v607
        %v611 = vpop.permute.xlu0 %610
        %v614 = vsel %vm315, %v604, 0
        %v617 = vsel %vm315, %v605, 0
        %v620 = vsel %vm315, %v606, 0
        %622 = vmatprep.subr.mxu0 0.0
        %623 = vmatpush1.xpose.msra.mxu0 %v617
        %624 = vmatprep.subr.mxu0 0.0
        %625 = vmatpush1.xpose.msra.mxu0 %v620
        %626 = vmatprep.subr.mxu0 0.0
        %627 = vmatpush1.xpose.msra.mxu0 0.0
        %628 = vmatprep.subr.mxu0 0.0
        %629 = vmatpush1.xpose.msra.mxu0 0.0
        %630 = vmatprep.subr.mxu0 0.0
        %631 = vmatpush1.xpose.msra.mxu0 0.0
        %632 = vmatprep.subr.mxu0 0.0
        %633 = vmatpush1.xpose.msra.mxu0 0.0
        %634 = vmatprep.subr.mxu0 0.0
        %635 = vmatpush1.xpose.msra.mxu0 0.0
        %636 = vmatprep.subr.mxu0 0.0
        %637 = vmatpush1.xpose.msra.mxu0 0.0
        %638 = vmatprep.subr.mxu0 0.0
        %639 = vmatpush1.xpose.msra.mxu0 0.0
        %640 = vmatprep.subr.mxu0 0.0
        %641 = vmatpush1.xpose.msra.mxu0 0.0
        %642 = vmatprep.subr.mxu0 0.0
        %643 = vmatpush1.xpose.msra.mxu0 0.0
        %644 = vmatprep.subr.mxu0 0.0
        %645 = vmatpush1.xpose.msra.mxu0 0.0
        %646 = vmatprep.subr.mxu0 0.0
        %647 = vmatpush1.xpose.msra.mxu0 0.0
        %648 = vmatprep.subr.mxu0 0.0
        %649 = vmatpush1.xpose.msra.mxu0 0.0
        %650 = vmatprep.subr.mxu0 0.0
        %651 = vmatpush1.xpose.msra.mxu0 0.0
        %652 = vmatprep.subr.mxu0 0.0
        %653 = vmatpush1.xpose.msra.mxu0 0.0
        %654 = vmatprep.subr.mxu0 0.0
        %655 = vmatpush1.xpose.msra.mxu0 0.0
        %656 = vmatprep.subr.mxu0 0.0
        %657 = vmatpush1.xpose.msra.mxu0 0.0
        %658 = vmatprep.subr.mxu0 0.0
        %659 = vmatpush1.xpose.msra.mxu0 0.0
        %660 = vmatprep.subr.mxu0 0.0
        %661 = vmatpush1.xpose.msra.mxu0 0.0
        %662 = vmatprep.subr.mxu0 0.0
        %663 = vmatpush1.xpose.msra.mxu0 0.0
        %664 = vmatprep.subr.mxu0 0.0
        %665 = vmatpush1.xpose.msra.mxu0 0.0
        %666 = vmatprep.subr.mxu0 0.0
        %667 = vmatpush1.xpose.msra.mxu0 0.0
        %668 = vmatprep.subr.mxu0 0.0
        %669 = vmatpush1.xpose.msra.mxu0 0.0
        %670 = vmatprep.subr.mxu0 0.0
        %671 = vmatpush1.xpose.msra.mxu0 0.0
        %672 = vmatprep.subr.mxu0 0.0
        %673 = vmatpush1.xpose.msra.mxu0 0.0
        %674 = vmatprep.subr.mxu0 0.0
        %675 = vmatpush1.xpose.msra.mxu0 0.0
        %676 = vmatprep.subr.mxu0 0.0
        %677 = vmatpush1.xpose.msra.mxu0 0.0
        %678 = vmatprep.subr.mxu0 0.0
        %679 = vmatpush1.xpose.msra.mxu0 0.0
        %680 = vmatprep.subr.mxu0 0.0
        %681 = vmatpush1.xpose.msra.mxu0 0.0
        %682 = vmatprep.subr.mxu0 0.0
        %683 = vmatpush1.xpose.msra.mxu0 0.0
        %684 = vmatprep.subr.mxu0 0.0
        %685 = vmatpush1.xpose.msra.mxu0 0.0
        %686 = vmatprep.mubr.f32.mxu0 0.0
        %687 = vmatmul.mubr.f32.gmra.mrb[0].mxu0 %v614
        %v688 = vpop.f32.mrb[0].mxu0
        %v689 = vadd.f32 %v611, %v688
        %v690 = vpop.f32.mrb[0].mxu0
        %691 = vdwg.mxu0
        %v692 = vand.u32 2147483647, %v689
        %v693 = vadd.f32 %v692, 1.0
        %v694 = vrcp.pop %v693
        %v695 = vmul.f32 %v689, %v694
        %v696 = vadd.f32 %v602, %v695
        %v697 = vxor.u32 %v603, 2147483648
        %v698 = vmul.f32 %v697, 1.442695
        %v699 = vpow.pop %v698
        %v700 = vadd.f32 %v699, 1.0
        %v701 = vrcp.pop %v700
        %v702 = vmul.f32 1.0, %v701
        %v703 = vmul.f32 %v696, %v702
        %v704 = vld [vmem:[%s297] sm:$0xff]
        %v705 = vadd.f32 %v703, %v704
        %v706 = vmul.f32 %v705, 0.70710677
        %707 = vst.msk [vmem:[%s290] sm:$0xff] %vm315, %v706
        %s708 = sand.u32 %s182, 1
        %s709 = scalar_lea.sflag [#allocation4], %s708
        %s710 = sand.u32 %s182, 1
        %s711 = smul.addr %s710, 8
        %s712 = scalar_lea.vmem [#allocation3], %s711
        // Predicated region
        $region53: #{tpu_custom_call.1} parent=43 // pred_check
          %p713 = pneg %p192
        $region54: #{tpu_custom_call.1} parent=43 // pred_check_branch
          %715 = sbr.rel (%p713) target = $region56
        $region55: #{tpu_custom_call.1} parent=43 // pred_region
          %s717 = ssub.s32 128, 128
          %718 = vsyncadd %s709, %s717
          %s719 = sadd.s32 %s25, %s24
          %s720 = smul.addr %s719, 128
          %s721 = scalar_lea.hbm %s6, %s720
          %s723 = sshll.u32 %s712, 4
          %s724 = int_to_ptr.vmem [resolvable:$true] %s723
          %726 = dma.vmem_to_hbm [thread:$0]  %s724, 128, %s721, %s709
        $region56: #{tpu_custom_call.1} parent=43 // pred_fallthru
          _
      $region44: #{tpu_custom_call.1} parent=5 // pred_fallthru
        _
      %p727 = scmp.le.s32.totalorder 2, %s15
      // Predicated region
      $region57: #{tpu_custom_call.1} parent=5 // pred_check
        %p728 = pneg %p727
      $region58: #{tpu_custom_call.1} parent=5 // pred_check_branch
        %730 = sbr.rel (%p728) target = $region60
      $region59: #{tpu_custom_call.1} parent=5 // pred_region
        %s731 = ssub.s32 %s15, 2
        // Predicated region
        $region61: #{tpu_custom_call.1} parent=59 // pred_check
          %p732 = pneg %p198
        $region62: #{tpu_custom_call.1} parent=59 // pred_check_branch
          %734 = sbr.rel (%p732) target = $region64
        $region63: #{tpu_custom_call.1} parent=59 // pred_region
          %s735 = sand.u32 %s183, 1
          %s736 = scalar_lea.sflag [#allocation4], %s735
          %s737 = sand.u32 %s183, 1
          %s738 = smul.addr %s737, 8
          %s739 = scalar_lea.vmem [#allocation3], %s738
          %740 = dma.done %s736, 128
        $region64: #{tpu_custom_call.1} parent=59 // pred_fallthru
          _
      $region60: #{tpu_custom_call.1} parent=5 // pred_fallthru
        _
    $region6: #{tpu_custom_call.1} parent=1 // loop_footer
      %s19 = sadd.s32 1, %s15
    $region7: #{tpu_custom_call.1} parent=1 // loop_footer_branch
      %14 = sbr.rel target = $region3
    $region8: #{tpu_custom_call.1} parent=1 // loop_exit
      _
    %741 = vsyncpa [#allocation4], 1
    %s742 = scalar_lea.sflag [#allocation4], 1
    %743 = vsyncpa %s742, 1

</llo_original>
